<compile_context>
chip_gen: v6e
topology: v6e:2x2x1
jax: 0.10.0
libtpu: 0.0.40
codegen_flags: <defaults>
</compile_context>

<pallas_src>
import functools

import jax
import jax.numpy as jnp
from jax import lax
from jax.experimental import pallas as pl
from jax.experimental.pallas import tpu as pltpu


def _residual_kernel(x_ref, w1_ref, w2_ref, o_ref, *, H, W, P):
    # x_ref : (1, C, HW + 2P) f32  flat NCHW input, zero-padded by P along flat HW
    # w1_ref: (C, 9C + 1)          3x3 weights (BN1 scale folded), taps stacked along K,
    #                              last column = folded BN1 shift
    # w2_ref: (C, C + 1)           1x1 weights (BN2 scale folded), last column = BN2 shift
    # o_ref : (1, C, HW)
    HW = H * W

    xv = x_ref[0]                      # (C, HW + 2P), single load of the padded block
    x_c = xv[:, P:P + HW]              # pre-ReLU center window (residual path)
    r = jnp.maximum(xv, 0.0)           # ReLU once on the whole padded block (halo stays 0)

    # Column-validity masks for the +/-1 lane shifts (avoid row wraparound), built in-kernel.
    col = lax.broadcasted_iota(jnp.int32, (1, HW), 1) % W
    mask_l = (col >= 1).astype(jnp.float32)       # left-neighbour tap must stay in-row
    mask_r = (col <= W - 2).astype(jnp.float32)   # right-neighbour tap must stay in-row

    # Stack the 9 shifted ReLU windows (+ ones row for the bias) along the contraction axis.
    taps = []
    for kh in range(3):
        for kw in range(3):
            off = (kh - 1) * W + (kw - 1)
            t = r[:, P + off:P + off + HW]        # static lane slice of the in-register value
            if kw == 0:
                t = t * mask_l
            elif kw == 2:
                t = t * mask_r
            taps.append(t)
    taps.append(jnp.ones((1, HW), jnp.float32))   # bias row (BN1 shift folded into w1)
    stacked = jnp.concatenate(taps, axis=0)       # (9C + 1, HW)

    # 3x3 conv + BN1 shift as one MXU dot, then ReLU.
    y = jnp.maximum(
        jnp.dot(w1_ref[...], stacked, preferred_element_type=jnp.float32), 0.0)

    # 1x1 conv + BN2 shift as one MXU dot (ones row folds the bias).
    y1 = jnp.concatenate([y, jnp.ones((1, HW), jnp.float32)], axis=0)   # (C + 1, HW)
    z = jnp.dot(w2_ref[...], y1, preferred_element_type=jnp.float32)

    o_ref[0] = x_c + z                                                  # residual add


def residual_forward(x_nchw, w1, w2, bn1, bn2, eps=1e-5):
    """x_nchw: (N, C, H, W); w1: (C, C, 3, 3); w2: (C, C, 1, 1); bn*: (gamma, beta, mean, var)."""
    N, C, H, W = x_nchw.shape
    HW = H * W
    P = W + 1                      # halo: every 3x3 tap offset is within [-(W+1), W+1]
    HWp = HW + 2 * P

    x_flat = x_nchw.reshape(N, C, HW).astype(jnp.float32)
    x_pad = jnp.pad(x_flat, ((0, 0), (0, 0), (P, P)))

    def fold_bn(bn):
        gamma, beta, mean, var = (a.astype(jnp.float32) for a in bn)
        s = gamma / jnp.sqrt(var + eps)
        return s, beta - mean * s

    s1, b1 = fold_bn(bn1)
    s2, b2 = fold_bn(bn2)

    # Fold BN scales into the conv weights; flatten the 9 taps into the contraction axis:
    #   w1_big[o, (kh*3+kw)*C + c] = s1[o] * w1[o, c, kh, kw]; last column = BN1 shift.
    w1s = w1.astype(jnp.float32) * s1[:, None, None, None]            # (O, I, 3, 3)
    w1_flat = jnp.transpose(w1s, (0, 2, 3, 1)).reshape(C, 9 * C)      # (O, 9I), tap-major
    w1_big = jnp.concatenate([w1_flat, b1[:, None]], axis=1)          # (C, 9C + 1)

    w2s = w2.astype(jnp.float32)[:, :, 0, 0] * s2[:, None]            # (O, I)
    w2_big = jnp.concatenate([w2s, b2[:, None]], axis=1)              # (C, C + 1)

    kernel = functools.partial(_residual_kernel, H=H, W=W, P=P)

    out = pl.pallas_call(
        kernel,
        out_shape=jax.ShapeDtypeStruct((N, C, HW), jnp.float32),
        grid_spec=pltpu.PrefetchScalarGridSpec(
            num_scalar_prefetch=0,
            grid=(N,),
            in_specs=[
                pl.BlockSpec((1, C, HWp), lambda n: (n, 0, 0)),       # x (padded flat HW)
                pl.BlockSpec((C, 9 * C + 1), lambda n: (0, 0)),       # stacked 3x3 weights
                pl.BlockSpec((C, C + 1), lambda n: (0, 0)),           # 1x1 weights
            ],
            out_specs=pl.BlockSpec((1, C, HW), lambda n: (n, 0, 0)),
        ),
        compiler_params=pltpu.CompilerParams(dimension_semantics=("parallel",)),
    )(x_pad, w1_big, w2_big)

    return out.reshape(N, C, H, W)


def residual_ref(x_nchw, w1, w2, bn1, bn2, eps=1e-5):
    """Pure-JAX reference (matches PyTorch eval-mode forward)."""
    def bn(t, params):
        g, b, m, v = params
        sh = (1, -1, 1, 1)
        return (t - m.reshape(sh)) / jnp.sqrt(v.reshape(sh) + eps) * g.reshape(sh) + b.reshape(sh)

    x = x_nchw.astype(jnp.float32)
    h = jnp.maximum(x, 0.0)
    y = lax.conv_general_dilated(h, w1, (1, 1), ((1, 1), (1, 1)),
                                 dimension_numbers=("NCHW", "OIHW", "NCHW"))
    y = jnp.maximum(bn(y, bn1), 0.0)
    z = lax.conv_general_dilated(y, w2, (1, 1), ((0, 0), (0, 0)),
                                 dimension_numbers=("NCHW", "OIHW", "NCHW"))
    return x + bn(z, bn2)


if __name__ == "__main__":
    N, C, H, W = 2, 4, 16, 16

    key = jax.random.PRNGKey(0)
    kx, kw1, kw2, kg1, kb1, km1, kv1, kg2, kb2, km2, kv2 = jax.random.split(key, 11)

    x = jax.random.normal(kx, (N, C, H, W), dtype=jnp.float32)

    # Deterministic parameters (shapes per nn.Conv2d / nn.BatchNorm2d in __init__)
    w1 = jax.random.normal(kw1, (C, C, 3, 3), dtype=jnp.float32) * (1.0 / (3.0 * (C ** 0.5)))
    w2 = jax.random.normal(kw2, (C, C, 1, 1), dtype=jnp.float32) * (1.0 / (C ** 0.5))
    bn1 = (jax.random.uniform(kg1, (C,), minval=0.5, maxval=1.5),
           jax.random.normal(kb1, (C,)) * 0.1,
           jax.random.normal(km1, (C,)) * 0.1,
           jax.random.uniform(kv1, (C,), minval=0.5, maxval=1.5))
    bn2 = (jax.random.uniform(kg2, (C,), minval=0.5, maxval=1.5),
           jax.random.normal(kb2, (C,)) * 0.1,
           jax.random.normal(km2, (C,)) * 0.1,
           jax.random.uniform(kv2, (C,), minval=0.5, maxval=1.5))

    out = residual_forward(x, w1, w2, bn1, bn2)
    out = jax.block_until_ready(out)

    ref = residual_ref(x, w1, w2, bn1, bn2)
    assert out.shape == (N, C, H, W)
    assert jnp.allclose(out, ref, atol=1e-4, rtol=1e-4), float(jnp.max(jnp.abs(out - ref)))

    print("KERNEL_OK")
</pallas_src>

<mosaic_0001>
module attributes {stable_mosaic.version = 11 : i64} {
  func.func @_residual_kernel(%arg0: i32, %arg1: memref<1x4x290xf32, #tpu.memory_space<vmem>>, %arg2: memref<4x37xf32, #tpu.memory_space<vmem>>, %arg3: memref<4x5xf32, #tpu.memory_space<vmem>>, %arg4: memref<1x4x256xf32, #tpu.memory_space<vmem>>) attributes {dimension_semantics = [#tpu.dimension_semantics<parallel>], iteration_bounds = array<i64: 2>, scalar_prefetch = 0 : i64, scratch_operands = 0 : i64, tpu.core_type = #tpu.core_type<tc>, window_params = [{transform_indices = @transform_0, window_bounds = array<i64: 1, 4, 290>}, {pipeline_mode = #tpu.pipeline_mode<synchronous>, transform_indices = @transform_1, window_bounds = array<i64: 4, 37>}, {pipeline_mode = #tpu.pipeline_mode<synchronous>, transform_indices = @transform_2, window_bounds = array<i64: 4, 5>}, {transform_indices = @transform_3, window_bounds = array<i64: 1, 4, 256>}]} {
    %c0 = arith.constant 0 : index
    %c0_0 = arith.constant 0 : index
    %c0_1 = arith.constant 0 : index
    %0 = vector.load %arg1[%c0, %c0_0, %c0_1] : memref<1x4x290xf32, #tpu.memory_space<vmem>>, vector<1x4x290xf32>
    %1 = vector.shape_cast %0 : vector<1x4x290xf32> to vector<4x290xf32>
    %2 = vector.extract_strided_slice %1 {offsets = [0, 17], sizes = [4, 256], strides = [1, 1]} : vector<4x290xf32> to vector<4x256xf32>
    %cst = arith.constant 0.000000e+00 : f32
    %3 = vector.broadcast %cst : f32 to vector<4x290xf32>
    %4 = arith.maximumf %1, %3 : vector<4x290xf32>
    %5 = tpu.iota {dimensions = array<i32: 1>} : vector<1x256xi32>
    %c16_i32 = arith.constant 16 : i32
    %c0_i32 = arith.constant 0 : i32
    %6 = arith.cmpi eq, %c16_i32, %c0_i32 : i32
    %c1_i32 = arith.constant 1 : i32
    %7 = arith.select %6, %c1_i32, %c16_i32 : i32
    %8 = vector.broadcast %7 : i32 to vector<1x256xi32>
    %9 = arith.remsi %5, %8 : vector<1x256xi32>
    %c0_i32_2 = arith.constant 0 : i32
    %10 = vector.broadcast %c0_i32_2 : i32 to vector<1x256xi32>
    %11 = arith.cmpi ne, %9, %10 : vector<1x256xi32>
    %c0_i32_3 = arith.constant 0 : i32
    %12 = vector.broadcast %c0_i32_3 : i32 to vector<1x256xi32>
    %13 = arith.cmpi slt, %9, %12 : vector<1x256xi32>
    %c0_i32_4 = arith.constant 0 : i32
    %14 = arith.cmpi slt, %7, %c0_i32_4 : i32
    %15 = vector.broadcast %14 : i1 to vector<1x256xi1>
    %16 = vector.broadcast %15 : vector<1x256xi1> to vector<1x256xi1>
    %17 = arith.xori %13, %16 : vector<1x256xi1>
    %18 = arith.andi %17, %11 : vector<1x256xi1>
    %19 = vector.broadcast %7 : i32 to vector<1x256xi32>
    %20 = arith.addi %9, %19 : vector<1x256xi32>
    %21 = arith.select %18, %20, %9 : vector<1x256xi1>, vector<1x256xi32>
    %c1_i32_5 = arith.constant 1 : i32
    %22 = vector.broadcast %c1_i32_5 : i32 to vector<1x256xi32>
    %23 = arith.cmpi sge, %21, %22 : vector<1x256xi32>
    %24 = arith.extui %23 : vector<1x256xi1> to vector<1x256xi32>
    %25 = arith.sitofp %24 : vector<1x256xi32> to vector<1x256xf32>
    %c14_i32 = arith.constant 14 : i32
    %26 = vector.broadcast %c14_i32 : i32 to vector<1x256xi32>
    %27 = arith.cmpi sle, %21, %26 : vector<1x256xi32>
    %28 = arith.extui %27 : vector<1x256xi1> to vector<1x256xi32>
    %29 = arith.sitofp %28 : vector<1x256xi32> to vector<1x256xf32>
    %30 = vector.extract_strided_slice %4 {offsets = [0, 0], sizes = [4, 256], strides = [1, 1]} : vector<4x290xf32> to vector<4x256xf32>
    %31 = vector.broadcast %25 : vector<1x256xf32> to vector<4x256xf32>
    %32 = arith.mulf %30, %31 : vector<4x256xf32>
    %33 = vector.extract_strided_slice %4 {offsets = [0, 1], sizes = [4, 256], strides = [1, 1]} : vector<4x290xf32> to vector<4x256xf32>
    %34 = vector.extract_strided_slice %4 {offsets = [0, 2], sizes = [4, 256], strides = [1, 1]} : vector<4x290xf32> to vector<4x256xf32>
    %35 = vector.broadcast %29 : vector<1x256xf32> to vector<4x256xf32>
    %36 = arith.mulf %34, %35 : vector<4x256xf32>
    %37 = vector.extract_strided_slice %4 {offsets = [0, 16], sizes = [4, 256], strides = [1, 1]} : vector<4x290xf32> to vector<4x256xf32>
    %38 = vector.broadcast %25 : vector<1x256xf32> to vector<4x256xf32>
    %39 = arith.mulf %37, %38 : vector<4x256xf32>
    %40 = vector.extract_strided_slice %4 {offsets = [0, 17], sizes = [4, 256], strides = [1, 1]} : vector<4x290xf32> to vector<4x256xf32>
    %41 = vector.extract_strided_slice %4 {offsets = [0, 18], sizes = [4, 256], strides = [1, 1]} : vector<4x290xf32> to vector<4x256xf32>
    %42 = vector.broadcast %29 : vector<1x256xf32> to vector<4x256xf32>
    %43 = arith.mulf %41, %42 : vector<4x256xf32>
    %44 = vector.extract_strided_slice %4 {offsets = [0, 32], sizes = [4, 256], strides = [1, 1]} : vector<4x290xf32> to vector<4x256xf32>
    %45 = vector.broadcast %25 : vector<1x256xf32> to vector<4x256xf32>
    %46 = arith.mulf %44, %45 : vector<4x256xf32>
    %47 = vector.extract_strided_slice %4 {offsets = [0, 33], sizes = [4, 256], strides = [1, 1]} : vector<4x290xf32> to vector<4x256xf32>
    %48 = vector.extract_strided_slice %4 {offsets = [0, 34], sizes = [4, 256], strides = [1, 1]} : vector<4x290xf32> to vector<4x256xf32>
    %49 = vector.broadcast %29 : vector<1x256xf32> to vector<4x256xf32>
    %50 = arith.mulf %48, %49 : vector<4x256xf32>
    %cst_6 = arith.constant 1.000000e+00 : f32
    %51 = vector.broadcast %cst_6 : f32 to vector<1x256xf32>
    %52 = tpu.concatenate %32, %33, %36, %39, %40, %43, %46, %47, %50, %51 in 0 : vector<4x256xf32>, vector<4x256xf32>, vector<4x256xf32>, vector<4x256xf32>, vector<4x256xf32>, vector<4x256xf32>, vector<4x256xf32>, vector<4x256xf32>, vector<4x256xf32>, vector<1x256xf32> -> vector<37x256xf32>
    %c0_7 = arith.constant 0 : index
    %c0_8 = arith.constant 0 : index
    %53 = vector.load %arg2[%c0_7, %c0_8] : memref<4x37xf32, #tpu.memory_space<vmem>>, vector<4x37xf32>
    %cst_9 = arith.constant dense<0.000000e+00> : vector<4x256xf32>
    %54 = tpu.matmul %53, %52, %cst_9 {dimension_numbers = #tpu.dot_dimension_numbers<[1], [0], [0], [1], [0, 0, 1, 1], [], []>} : vector<4x37xf32>, vector<37x256xf32>, vector<4x256xf32> -> vector<4x256xf32>
    %cst_10 = arith.constant 0.000000e+00 : f32
    %55 = vector.broadcast %cst_10 : f32 to vector<4x256xf32>
    %56 = arith.maximumf %54, %55 : vector<4x256xf32>
    %cst_11 = arith.constant 1.000000e+00 : f32
    %57 = vector.broadcast %cst_11 : f32 to vector<1x256xf32>
    %58 = tpu.concatenate %56, %57 in 0 : vector<4x256xf32>, vector<1x256xf32> -> vector<5x256xf32>
    %c0_12 = arith.constant 0 : index
    %c0_13 = arith.constant 0 : index
    %59 = vector.load %arg3[%c0_12, %c0_13] : memref<4x5xf32, #tpu.memory_space<vmem>>, vector<4x5xf32>
    %cst_14 = arith.constant dense<0.000000e+00> : vector<4x256xf32>
    %60 = tpu.matmul %59, %58, %cst_14 {dimension_numbers = #tpu.dot_dimension_numbers<[1], [0], [0], [1], [0, 0, 1, 1], [], []>} : vector<4x5xf32>, vector<5x256xf32>, vector<4x256xf32> -> vector<4x256xf32>
    %61 = arith.addf %2, %60 : vector<4x256xf32>
    %c0_15 = arith.constant 0 : index
    %c0_16 = arith.constant 0 : index
    %c0_17 = arith.constant 0 : index
    %62 = vector.load %arg4[%c0_15, %c0_16, %c0_17] : memref<1x4x256xf32, #tpu.memory_space<vmem>>, vector<1x4x256xf32>
    %63 = vector.shape_cast %62 : vector<1x4x256xf32> to vector<4x256xf32>
    %64 = vector.shape_cast %61 : vector<4x256xf32> to vector<1x4x256xf32>
    tpu.vector_store %arg4[%c0_15, %c0_16, %c0_17], %64 {strides = array<i32>} : memref<1x4x256xf32, #tpu.memory_space<vmem>>, vector<1x4x256xf32>,
    return
  }
  func.func @transform_0(%arg0: i32) -> (i32, i32, i32) {
    %c0_i32 = arith.constant 0 : i32
    %c0_i32_0 = arith.constant 0 : i32
    %c0_i32_1 = arith.constant 0 : i32
    return %arg0, %c0_i32, %c0_i32_0 : i32, i32, i32
  }
  func.func @transform_1(%arg0: i32) -> (i32, i32) {
    %c0_i32 = arith.constant 0 : i32
    %c0_i32_0 = arith.constant 0 : i32
    %c0_i32_1 = arith.constant 0 : i32
    return %c0_i32, %c0_i32_0 : i32, i32
  }
  func.func @transform_2(%arg0: i32) -> (i32, i32) {
    %c0_i32 = arith.constant 0 : i32
    %c0_i32_0 = arith.constant 0 : i32
    %c0_i32_1 = arith.constant 0 : i32
    return %c0_i32, %c0_i32_0 : i32, i32
  }
  func.func @transform_3(%arg0: i32) -> (i32, i32, i32) {
    %c0_i32 = arith.constant 0 : i32
    %c0_i32_0 = arith.constant 0 : i32
    %c0_i32_1 = arith.constant 0 : i32
    return %arg0, %c0_i32, %c0_i32_0 : i32, i32, i32
  }
}

</mosaic_0001>

<llo_original>
// kernel: tpu_custom_call.1
$region0: #{tpu_custom_call.1}
  #allocation0 [shape = 'u32[]', space=smem, size = 0x4, offset = 0x4, fixed_abs, tag = 'smem constant byte address 0x4 - core index']
  #allocation1 [shape = 'u32[144,128]{1,0:T(1,128)}', space=vmem, size = 0x12000, scoped, tag = 'internal scratch']
  %s0 = inlined_call_operand.hbm [shape: f32[2,4,290], index: 0, kind: input, shape index: {}]
  %s1 = inlined_call_operand.hbm [shape: f32[4,37], index: 1, kind: input, shape index: {}]
  %s2 = inlined_call_operand.hbm [shape: f32[4,5], index: 2, kind: input, shape index: {}]
  %s3 = inlined_call_operand.hbm [shape: f32[2,4,256], index: 3, kind: output, shape index: {}]
  %s4 = sld [smem:[#allocation0]]
  $region57: #{tpu_custom_call.1} parent=0
    _
  %s6 = ssub.s32 1, %s4
  %s7 = scalar_select 0, %s6, %s4
  $region1: #{tpu_custom_call.1} parent=0
    #allocation2 [shape = 'u8[12288]{0}', space=vmem, size = 0x3000, scoped, tag = 'input window, operand 0']
    #allocation3 [shape = 's32[2]{0}', space=sflag, size = 0x8, scoped, tag = 'scoped memory for tpu_custom_call.1']
    #allocation4 [shape = 's32[2]{0}', space=sflag, size = 0x8, scoped, tag = 'scoped memory for tpu_custom_call.1']
    #allocation5 [shape = 'u8[2048]{0}', space=vmem, size = 0x800, scoped, tag = 'input window, operand 1, single buffered']
    #allocation6 [shape = 's32[1]{0}', space=sflag, size = 0x4, scoped, tag = 'scoped memory for tpu_custom_call.1']
    #allocation7 [shape = 'u8[2048]{0}', space=vmem, size = 0x800, scoped, tag = 'input window, operand 2, single buffered']
    #allocation8 [shape = 'u8[8192]{0}', space=vmem, size = 0x2000, scoped, tag = 'output window, operand 0']
    %8 = vsyncpa [#allocation3], 0
    %s9 = scalar_lea.sflag [#allocation3], 1
    %10 = vsyncpa %s9, 0
    %11 = vsyncpa [#allocation6], 0
    %12 = vsyncpa [#allocation4], 0
    %s13 = scalar_lea.sflag [#allocation4], 1
    %14 = vsyncpa %s13, 0
    loop: start=0, step=1, limit=4
    $region2: #{tpu_custom_call.1} parent=1 // loop_pre_header
      _
    $region3: #{tpu_custom_call.1} parent=1 // loop_header
      %s16 = sphi 0, %s20
      %p17 = scmp.ge.s32.totalorder %s16, 4
      %s26 = sphi 0, %s28
      %s29 = sphi 0, %s26
      %s30 = sphi 0, %s29
      %s46 = sphi 0, %s30
      %s50 = sphi 0, %s50
      %s52 = sphi 0, %s50
      %s53 = sphi 0, %s52
      %s67 = sphi 0, %s53
      %s71 = sphi 0, %s71
      %s73 = sphi 0, %s71
      %s74 = sphi 0, %s73
      %s88 = sphi 0, %s74
      %s94 = sphi 0, %s96
      %s97 = sphi 0, %s94
      %s98 = sphi 0, %s97
      %s114 = sphi 0, %s98
    $region4: #{tpu_custom_call.1} parent=1 // loop_header_branch
      %19 = sbr.rel (%p17) target = $region8
    $region5: #{tpu_custom_call.1} parent=1 // loop_body
      %s21 = ssub.s32 %s16, 1
      %s22 = ssub.s32 %s16, 2
      %s23 = sadd.s32 %s16, 1
      %s24 = ssub.s32 %s16, %s23
      %p25 = scmp.eq.s32.totalorder %s24, 0
      %s27 = sadd.s32 %s26, 1
      %s28 = scalar_select %p25, %s26, %s27
      %p31 = pneg %p25
      %p32 = scmp.eq.s32.totalorder %s16, 1
      %p33 = por %p31, %p32
      %p34 = scmp.ne.s32.totalorder %s26, %s29
      %p35 = scmp.eq.s32.totalorder %s16, 0
      %p36 = por %p34, %p35
      %p37 = scmp.ne.s32.totalorder %s26, %s29
      %p38 = scmp.eq.s32.totalorder %s21, 1
      %p39 = por %p37, %p38
      %p40 = scmp.ne.s32.totalorder %s29, %s30
      %p41 = scmp.eq.s32.totalorder %s21, 0
      %p42 = por %p40, %p41
      %p43 = scmp.ne.s32.totalorder %s29, %s30
      %p44 = scmp.eq.s32.totalorder %s22, 1
      %p45 = por %p43, %p44
      %p47 = scmp.ne.s32.totalorder %s30, %s46
      %p48 = scmp.eq.s32.totalorder %s22, 0
      %p49 = por %p47, %p48
      %s51 = sadd.s32 %s50, 1
      %p54 = scmp.eq.s32.totalorder %s16, 1
      %p55 = scmp.ne.s32.totalorder %s50, %s52
      %p56 = scmp.eq.s32.totalorder %s16, 0
      %p57 = por %p55, %p56
      %p58 = scmp.ne.s32.totalorder %s50, %s52
      %p59 = scmp.eq.s32.totalorder %s21, 1
      %p60 = por %p58, %p59
      %p61 = scmp.ne.s32.totalorder %s52, %s53
      %p62 = scmp.eq.s32.totalorder %s21, 0
      %p63 = por %p61, %p62
      %p64 = scmp.ne.s32.totalorder %s52, %s53
      %p65 = scmp.eq.s32.totalorder %s22, 1
      %p66 = por %p64, %p65
      %p68 = scmp.ne.s32.totalorder %s53, %s67
      %p69 = scmp.eq.s32.totalorder %s22, 0
      %p70 = por %p68, %p69
      %s72 = sadd.s32 %s71, 1
      %p75 = scmp.eq.s32.totalorder %s16, 1
      %p76 = scmp.ne.s32.totalorder %s71, %s73
      %p77 = scmp.eq.s32.totalorder %s16, 0
      %p78 = por %p76, %p77
      %p79 = scmp.ne.s32.totalorder %s71, %s73
      %p80 = scmp.eq.s32.totalorder %s21, 1
      %p81 = por %p79, %p80
      %p82 = scmp.ne.s32.totalorder %s73, %s74
      %p83 = scmp.eq.s32.totalorder %s21, 0
      %p84 = por %p82, %p83
      %p85 = scmp.ne.s32.totalorder %s73, %s74
      %p86 = scmp.eq.s32.totalorder %s22, 1
      %p87 = por %p85, %p86
      %p89 = scmp.ne.s32.totalorder %s74, %s88
      %p90 = scmp.eq.s32.totalorder %s22, 0
      %p91 = por %p89, %p90
      %s92 = ssub.s32 %s16, %s23
      %p93 = scmp.eq.s32.totalorder %s92, 0
      %s95 = sadd.s32 %s94, 1
      %s96 = scalar_select %p93, %s94, %s95
      %p99 = pneg %p93
      %p100 = scmp.eq.s32.totalorder %s16, 1
      %p101 = por %p99, %p100
      %p102 = scmp.ne.s32.totalorder %s94, %s97
      %p103 = scmp.eq.s32.totalorder %s16, 0
      %p104 = por %p102, %p103
      %p105 = scmp.ne.s32.totalorder %s94, %s97
      %p106 = scmp.eq.s32.totalorder %s21, 1
      %p107 = por %p105, %p106
      %p108 = scmp.ne.s32.totalorder %s97, %s98
      %p109 = scmp.eq.s32.totalorder %s21, 0
      %p110 = por %p108, %p109
      %p111 = scmp.ne.s32.totalorder %s97, %s98
      %p112 = scmp.eq.s32.totalorder %s22, 1
      %p113 = por %p111, %p112
      %p115 = scmp.ne.s32.totalorder %s98, %s114
      %p116 = scmp.eq.s32.totalorder %s22, 0
      %p117 = por %p115, %p116
      %p118 = scmp.le.s32.totalorder 1, %s16
      %p119 = scmp.lt.s32.totalorder %s16, 3
      %p120 = pnand %p118, %p119
      %p121 = pneg %p120
      // Predicated region
      $region9: #{tpu_custom_call.1} parent=5 // pred_check
        _
      $region10: #{tpu_custom_call.1} parent=5 // pred_check_branch
        %123 = sbr.rel (%p120) target = $region12
      $region11: #{tpu_custom_call.1} parent=5 // pred_region
        %s124 = ssub.s32 %s16, 1
        // Predicated region
        $region13: #{tpu_custom_call.1} parent=11 // pred_check
          %p125 = pneg %p63
        $region14: #{tpu_custom_call.1} parent=11 // pred_check_branch
          %127 = sbr.rel (%p125) target = $region16
        $region15: #{tpu_custom_call.1} parent=11 // pred_region
          %s129 = ssub.s32 64, 64
          %130 = vsyncadd [#allocation6], %s129
          %s132 = sshll.u32 [#allocation5], 4
          %s133 = int_to_ptr.vmem [resolvable:$true] %s132
          %135 = dma.hbm_to_vmem [thread:$0]  %s1, 64, %s133, [#allocation6]
        $region16: #{tpu_custom_call.1} parent=11 // pred_fallthru
          _
        // Predicated region
        $region17: #{tpu_custom_call.1} parent=11 // pred_check
          %p136 = pneg %p84
        $region18: #{tpu_custom_call.1} parent=11 // pred_check_branch
          %138 = sbr.rel (%p136) target = $region20
        $region19: #{tpu_custom_call.1} parent=11 // pred_region
          %s140 = ssub.s32 64, 64
          %141 = vsyncadd [#allocation6], %s140
          %s143 = sshll.u32 [#allocation7], 4
          %s144 = int_to_ptr.vmem [resolvable:$true] %s143
          %146 = dma.hbm_to_vmem [thread:$0]  %s2, 64, %s144, [#allocation6]
        $region20: #{tpu_custom_call.1} parent=11 // pred_fallthru
          _
      $region12: #{tpu_custom_call.1} parent=5 // pred_fallthru
        _
      %p147 = scmp.lt.s32.totalorder %s16, 2
      // Predicated region
      $region21: #{tpu_custom_call.1} parent=5 // pred_check
        %p148 = pneg %p147
      $region22: #{tpu_custom_call.1} parent=5 // pred_check_branch
        %150 = sbr.rel (%p148) target = $region24
      $region23: #{tpu_custom_call.1} parent=5 // pred_region
        // Predicated region
        $region25: #{tpu_custom_call.1} parent=23 // pred_check
          %p151 = pneg %p36
        $region26: #{tpu_custom_call.1} parent=23 // pred_check_branch
          %153 = sbr.rel (%p151) target = $region28
        $region27: #{tpu_custom_call.1} parent=23 // pred_region
          %s154 = sand.u32 %s26, 1
          %s155 = scalar_lea.sflag [#allocation3], %s154
          %s156 = sand.u32 %s26, 1
          %s157 = smul.addr %s156, 12
          %s158 = scalar_lea.vmem [#allocation2], %s157
          %s160 = ssub.s32 192, 192
          %161 = vsyncadd %s155, %s160
          %s162 = smul.addr %s16, 3
          %s163 = smul.addr %s162, 64
          %s164 = scalar_lea.hbm %s0, %s163
          %s166 = sshll.u32 %s158, 4
          %s167 = int_to_ptr.vmem [resolvable:$true] %s166
          %169 = dma.hbm_to_vmem [thread:$0]  %s164, 192, %s167, %s155
        $region28: #{tpu_custom_call.1} parent=23 // pred_fallthru
          _
      $region24: #{tpu_custom_call.1} parent=5 // pred_fallthru
        _
      %p170 = scmp.le.s32.totalorder 1, %s16
      %p171 = scmp.lt.s32.totalorder %s16, 3
      %p172 = pnand %p170, %p171
      %p173 = pneg %p172
      // Predicated region
      $region29: #{tpu_custom_call.1} parent=5 // pred_check
        _
      $region30: #{tpu_custom_call.1} parent=5 // pred_check_branch
        %175 = sbr.rel (%p172) target = $region32
      $region31: #{tpu_custom_call.1} parent=5 // pred_region
        %s176 = ssub.s32 %s16, 1
        %s177 = sand.u32 %s29, 1
        %s178 = scalar_lea.sflag [#allocation3], %s177
        %s179 = sand.u32 %s29, 1
        %s180 = smul.addr %s179, 12
        %s181 = scalar_lea.vmem [#allocation2], %s180
        // Predicated region
        $region33: #{tpu_custom_call.1} parent=31 // pred_check
          %p182 = pneg %p42
        $region34: #{tpu_custom_call.1} parent=31 // pred_check_branch
          %184 = sbr.rel (%p182) target = $region36
        $region35: #{tpu_custom_call.1} parent=31 // pred_region
          %185 = dma.done %s178, 192
        $region36: #{tpu_custom_call.1} parent=31 // pred_fallthru
          _
        // Predicated region
        $region37: #{tpu_custom_call.1} parent=31 // pred_check
          %p186 = pneg %p63
        $region38: #{tpu_custom_call.1} parent=31 // pred_check_branch
          %188 = sbr.rel (%p186) target = $region40
        $region39: #{tpu_custom_call.1} parent=31 // pred_region
          %189 = dma.done [#allocation6], 64
        $region40: #{tpu_custom_call.1} parent=31 // pred_fallthru
          _
        // Predicated region
        $region41: #{tpu_custom_call.1} parent=31 // pred_check
          %p190 = pneg %p84
        $region42: #{tpu_custom_call.1} parent=31 // pred_check_branch
          %192 = sbr.rel (%p190) target = $region44
        $region43: #{tpu_custom_call.1} parent=31 // pred_region
          %193 = dma.done [#allocation6], 64
        $region44: #{tpu_custom_call.1} parent=31 // pred_fallthru
          _
        %s194 = sand.u32 %s29, 1
        %s195 = scalar_lea.sflag [#allocation3], %s194
        %s196 = sand.u32 %s29, 1
        %s197 = smul.addr %s196, 12
        %s198 = scalar_lea.vmem [#allocation2], %s197
        %p199 = pneg %p42
        %p200 = pneg %p39
        %p201 = pneg %p63
        %p202 = pneg %p60
        %p203 = pneg %p84
        %p204 = pneg %p81
        %p205 = pneg %p110
        %p206 = pneg %p107
        %s207 = sand.u32 %s97, 1
        %s208 = scalar_lea.sflag [#allocation4], %s207
        %s209 = sand.u32 %s97, 1
        %s210 = smul.addr %s209, 8
        %s211 = scalar_lea.vmem [#allocation8], %s210
        %v212 = vld [vmem:[%s181] sm:$0xff]
        %v213 = vld [vmem:[%s181 + $0x8] sm:$0xf]
        %v214 = vmax.f32 %v212, 0.0
        %v215 = vmax.f32 %v213, 0.0
        %v216 = vlaneseq
        %v217 = vand.u32 %v216, 127
        %v218 = vadd.s32 %v217, 128
        %vm219 = vcmp.lt.s32.totalorder %v217, 0
        %v220 = vsub.s32 0, %v217
        %v221 = vsel %vm219, %v220, %v217
        %v222 = vshrl.u32 %v221, 4
        %v223 = vand.u32 %v221, 15
        %v224 = vsub.s32 0, %v223
        %v225 = vsel %vm219, %v224, %v223
        %vm226 = vcmp.lt.s32.totalorder %v218, 0
        %v227 = vsub.s32 0, %v218
        %v228 = vsel %vm226, %v227, %v218
        %v229 = vshrl.u32 %v228, 4
        %v230 = vand.u32 %v228, 15
        %v231 = vsub.s32 0, %v230
        %v232 = vsel %vm226, %v231, %v230
        %vm233 = vcmp.ne.s32.totalorder %v225, 0
        %vm234 = vcmp.ne.s32.totalorder %v232, 0
        %vm235 = vcmp.lt.s32.totalorder %v225, 0
        %vm236 = vcmp.lt.s32.totalorder %v232, 0
        %vm237 = vmand %vm235, %vm233
        %vm238 = vmand %vm236, %vm234
        %v239 = vadd.s32 %v225, 16
        %v240 = vadd.s32 %v232, 16
        %v241 = vsel %vm237, %v239, %v225
        %v242 = vsel %vm238, %v240, %v232
        %vm243 = vcmp.ge.s32.totalorder %v241, 1
        %vm244 = vcmp.ge.s32.totalorder %v242, 1
        %v245 = vsel %vm243, 1, 0
        %v246 = vsel %vm244, 1, 0
        %v247 = vcvt.s32.f32 %v245
        %v248 = vcvt.s32.f32 %v246
        %vm249 = vcmp.le.s32.totalorder %v241, 14
        %vm250 = vcmp.le.s32.totalorder %v242, 14
        %v251 = vsel %vm249, 1, 0
        %v252 = vsel %vm250, 1, 0
        %v253 = vcvt.s32.f32 %v251
        %v254 = vcvt.s32.f32 %v252
        %v257 = vcombine.low %v247, %v248
        %v259 = vmul.f32 %v214, %v257
        %v262 = vcombine.low %v253, %v254
        %263 = vrot.lane.b32.xlu0 %v262, 2
        %v264 = vpop.permute.xlu0 %263
        %v265 = vrot.slane %v264, 4
        %vm266 = vcmask 15360
        %v267 = vsel %vm266, %v265, %v264
        %v270 = vmul.f32 %v214, %v267
        %v271 = vmul.f32 %v215, %v265
        %272 = vrot.lane.b32.xlu0 %v257, 16
        %v273 = vpop.permute.xlu0 %272
        %v274 = vrot.slane %v273, 4
        %vm275 = vcmask 130048
        %v276 = vsel %vm275, %v274, %v273
        %v279 = vmul.f32 %v214, %v276
        %v280 = vmul.f32 %v215, %v274
        %281 = vrot.lane.b32.xlu0 %v262, 18
        %v282 = vpop.permute.xlu0 %281
        %v283 = vrot.slane %v282, 4
        %vm284 = vcmask 146432
        %v285 = vsel %vm284, %v283, %v282
        %v288 = vmul.f32 %v214, %v285
        %v289 = vmul.f32 %v215, %v283
        %290 = vrot.lane.b32.xlu0 %v257, 32
        %v291 = vpop.permute.xlu0 %290
        %v292 = vrot.slane %v291, 4
        %vm293 = vcmask 261120
        %v294 = vsel %vm293, %v292, %v291
        %v297 = vmul.f32 %v214, %v294
        %v298 = vmul.f32 %v215, %v292
        %299 = vrot.lane.b32.xlu0 %v262, 34
        %v300 = vpop.permute.xlu0 %299
        %v301 = vrot.slane %v300, 4
        %vm302 = vcmask 277504
        %v303 = vsel %vm302, %v301, %v300
        %v306 = vmul.f32 %v214, %v303
        %v307 = vmul.f32 %v215, %v301
        %v309 = vcombine.high %v259, %v259
        %v313 = vcombine.low %v214, %v214
        %v314 = vcombine.low %v215, %v215
        %315 = vrot.lane.b32.xlu0 %v313, 127
        %v316 = vpop.permute.xlu0 %315
        %317 = vrot.lane.b32.xlu0 %v214, 127
        %v318 = vpop.permute.xlu0 %317
        %319 = vrot.lane.b32.xlu0 %v314, 127
        %v320 = vpop.permute.xlu0 %319
        %vm321 = vcmask 1039360
        %v322 = vsel %vm321, %v316, %v318
        %v323 = vsel %vm321, %v318, %v320
        %v328 = vcombine.high %v270, %v270
        %329 = vrot.lane.b32.xlu0 %v270, 126
        %v330 = vpop.permute.xlu0 %329
        %331 = vrot.lane.b32.xlu0 %v328, 126
        %v332 = vpop.permute.xlu0 %331
        %333 = vrot.lane.b32.xlu0 %v271, 126
        %v334 = vpop.permute.xlu0 %333
        %vm335 = vcmask 1031168
        %v336 = vsel %vm335, %v330, %v332
        %v337 = vsel %vm335, %v332, %v334
        %v342 = vcombine.low %v279, %v279
        %v343 = vcombine.low %v280, %v280
        %344 = vrot.lane.b32.xlu0 %v342, 112
        %v345 = vpop.permute.xlu0 %344
        %346 = vrot.lane.b32.xlu0 %v279, 112
        %v347 = vpop.permute.xlu0 %346
        %348 = vrot.lane.b32.xlu0 %v343, 112
        %v349 = vpop.permute.xlu0 %348
        %vm350 = vcmask 916480
        %v351 = vsel %vm350, %v345, %v347
        %v352 = vsel %vm350, %v347, %v349
        %v355 = vcombine.high %v214, %v214
        %356 = vrot.lane.b32.xlu0 %v214, 111
        %v357 = vpop.permute.xlu0 %356
        %358 = vrot.lane.b32.xlu0 %v355, 111
        %v359 = vpop.permute.xlu0 %358
        %360 = vrot.lane.b32.xlu0 %v215, 111
        %v361 = vpop.permute.xlu0 %360
        %vm362 = vcmask 908288
        %v363 = vsel %vm362, %v357, %v359
        %v364 = vsel %vm362, %v359, %v361
        %v369 = vcombine.low %v288, %v288
        %v370 = vcombine.low %v289, %v289
        %371 = vrot.lane.b32.xlu0 %v369, 110
        %v372 = vpop.permute.xlu0 %371
        %373 = vrot.lane.b32.xlu0 %v288, 110
        %v374 = vpop.permute.xlu0 %373
        %375 = vrot.lane.b32.xlu0 %v370, 110
        %v376 = vpop.permute.xlu0 %375
        %vm377 = vcmask 900096
        %v378 = vsel %vm377, %v372, %v374
        %v379 = vsel %vm377, %v374, %v376
        %v384 = vcombine.high %v297, %v297
        %385 = vrot.lane.b32.xlu0 %v297, 96
        %v386 = vpop.permute.xlu0 %385
        %387 = vrot.lane.b32.xlu0 %v384, 96
        %v388 = vpop.permute.xlu0 %387
        %389 = vrot.lane.b32.xlu0 %v298, 96
        %v390 = vpop.permute.xlu0 %389
        %vm391 = vcmask 785408
        %v392 = vsel %vm391, %v386, %v388
        %v393 = vsel %vm391, %v388, %v390
        %396 = vrot.lane.b32.xlu0 %v313, 95
        %v397 = vpop.permute.xlu0 %396
        %398 = vrot.lane.b32.xlu0 %v214, 95
        %v399 = vpop.permute.xlu0 %398
        %400 = vrot.lane.b32.xlu0 %v314, 95
        %v401 = vpop.permute.xlu0 %400
        %vm402 = vcmask 777216
        %v403 = vsel %vm402, %v397, %v399
        %v404 = vsel %vm402, %v399, %v401
        %v409 = vcombine.high %v306, %v306
        %410 = vrot.lane.b32.xlu0 %v306, 94
        %v411 = vpop.permute.xlu0 %410
        %412 = vrot.lane.b32.xlu0 %v409, 94
        %v413 = vpop.permute.xlu0 %412
        %414 = vrot.lane.b32.xlu0 %v307, 94
        %v415 = vpop.permute.xlu0 %414
        %vm416 = vcmask 769024
        %v417 = vsel %vm416, %v411, %v413
        %v418 = vsel %vm416, %v413, %v415
        %vm421 = vcmask 1043456
        %v422 = vsel %vm421, %v259, %v322
        %v423 = vsel %vm421, %v309, %v323
        %v424 = vsel %vm421, %v336, %v351
        %v425 = vsel %vm421, %v337, %v352
        %v426 = vsel %vm421, %v363, %v378
        %v427 = vsel %vm421, %v364, %v379
        %v428 = vsel %vm421, %v392, %v403
        %v429 = vsel %vm421, %v393, %v404
        %v430 = vsel %vm421, %v417, 1.0
        %v431 = vsel %vm421, %v418, 1.0
        %v432 = vld [vmem:[#allocation5] sm:$0xf]
        %vm433 = vcmask 302080
        %v435 = vsel %vm433, %v432, 0
        %vm437 = vcmask 1044480
        %v439 = vsel %vm437, %v430, 0
        %v442 = vsel %vm437, %v431, 0
        %444 = vmatprep.subr.mxu0 0.0
        %445 = vmatpush1.msra.mxu0 0.0
        %446 = vmatprep.subr.mxu0 0.0
        %447 = vmatpush1.msra.mxu0 0.0
        %448 = vmatprep.subr.mxu0 0.0
        %449 = vmatpush1.msra.mxu0 0.0
        %450 = vmatprep.subr.mxu0 0.0
        %451 = vmatpush1.msra.mxu0 0.0
        %452 = vmatprep.subr.mxu0 0.0
        %453 = vmatpush1.msra.mxu0 0.0
        %454 = vmatprep.subr.mxu0 0.0
        %455 = vmatpush1.msra.mxu0 0.0
        %456 = vmatprep.subr.mxu0 0.0
        %457 = vmatpush1.msra.mxu0 0.0
        %458 = vmatprep.subr.mxu0 0.0
        %459 = vmatpush1.msra.mxu0 0.0
        %460 = vmatprep.subr.mxu0 0.0
        %461 = vmatpush1.msra.mxu0 0.0
        %462 = vmatprep.subr.mxu0 0.0
        %463 = vmatpush1.msra.mxu0 0.0
        %464 = vmatprep.subr.mxu0 0.0
        %465 = vmatpush1.msra.mxu0 0.0
        %466 = vmatprep.subr.mxu0 %v442
        %467 = vmatpush1.msra.mxu0 %v439
        %468 = vmatprep.subr.mxu0 %v429
        %469 = vmatpush1.msra.mxu0 %v428
        %470 = vmatprep.subr.mxu0 %v427
        %471 = vmatpush1.msra.mxu0 %v426
        %472 = vmatprep.subr.mxu0 %v425
        %473 = vmatpush1.msra.mxu0 %v424
        %474 = vmatprep.subr.mxu0 %v423
        %475 = vmatpush1.msra.mxu0 %v422
        %476 = vmatprep.subr.mxu0 0.0
        %477 = vmatpush2.msra.mxu0 0.0
        %478 = vmatprep.subr.mxu0 0.0
        %479 = vmatpush2.msra.mxu0 0.0
        %480 = vmatprep.subr.mxu0 0.0
        %481 = vmatpush2.msra.mxu0 0.0
        %482 = vmatprep.subr.mxu0 0.0
        %483 = vmatpush2.msra.mxu0 0.0
        %484 = vmatprep.subr.mxu0 0.0
        %485 = vmatpush2.msra.mxu0 0.0
        %486 = vmatprep.subr.mxu0 0.0
        %487 = vmatpush2.msra.mxu0 0.0
        %488 = vmatprep.subr.mxu0 0.0
        %489 = vmatpush2.msra.mxu0 0.0
        %490 = vmatprep.subr.mxu0 0.0
        %491 = vmatpush2.msra.mxu0 0.0
        %492 = vmatprep.subr.mxu0 0.0
        %493 = vmatpush2.msra.mxu0 0.0
        %494 = vmatprep.subr.mxu0 0.0
        %495 = vmatpush2.msra.mxu0 0.0
        %496 = vmatprep.subr.mxu0 0.0
        %497 = vmatpush2.msra.mxu0 0.0
        %498 = vmatprep.subr.mxu0 0.0
        %499 = vmatpush2.msra.mxu0 0.0
        %500 = vmatprep.subr.mxu0 0.0
        %501 = vmatpush2.msra.mxu0 0.0
        %502 = vmatprep.subr.mxu0 0.0
        %503 = vmatpush2.msra.mxu0 0.0
        %504 = vmatprep.subr.mxu0 0.0
        %505 = vmatpush2.msra.mxu0 0.0
        %506 = vmatprep.subr.mxu0 0.0
        %507 = vmatpush2.msra.mxu0 0.0
        %508 = vmatprep.mubr.f32.mxu0 0.0
        %509 = vmatmul.mubr.f32.gmra.mxu0 %v435
        %v510 = vpop.f32.mrf.mxu0
        %v511 = vadd.f32 0.0, %v510
        %v512 = vpop.f32.mrf.mxu0
        %v513 = vadd.f32 0.0, %v512
        %514 = vdwg.mxu0
        %v515 = vmax.f32 %v511, 0.0
        %v516 = vmax.f32 %v513, 0.0
        %v517 = vsel %vm421, %v515, 1.0
        %v518 = vsel %vm421, %v516, 1.0
        %v519 = vld [vmem:[#allocation7] sm:$0xf]
        %vm520 = vcmask 39936
        %v522 = vsel %vm520, %v519, 0
        %v525 = vsel %vm437, %v517, 0
        %v528 = vsel %vm437, %v518, 0
        %530 = vmatprep.subr.mxu0 0.0
        %531 = vmatpush1.msra.mxu0 0.0
        %532 = vmatprep.subr.mxu0 0.0
        %533 = vmatpush1.msra.mxu0 0.0
        %534 = vmatprep.subr.mxu0 0.0
        %535 = vmatpush1.msra.mxu0 0.0
        %536 = vmatprep.subr.mxu0 0.0
        %537 = vmatpush1.msra.mxu0 0.0
        %538 = vmatprep.subr.mxu0 0.0
        %539 = vmatpush1.msra.mxu0 0.0
        %540 = vmatprep.subr.mxu0 0.0
        %541 = vmatpush1.msra.mxu0 0.0
        %542 = vmatprep.subr.mxu0 0.0
        %543 = vmatpush1.msra.mxu0 0.0
        %544 = vmatprep.subr.mxu0 0.0
        %545 = vmatpush1.msra.mxu0 0.0
        %546 = vmatprep.subr.mxu0 0.0
        %547 = vmatpush1.msra.mxu0 0.0
        %548 = vmatprep.subr.mxu0 0.0
        %549 = vmatpush1.msra.mxu0 0.0
        %550 = vmatprep.subr.mxu0 0.0
        %551 = vmatpush1.msra.mxu0 0.0
        %552 = vmatprep.subr.mxu0 0.0
        %553 = vmatpush1.msra.mxu0 0.0
        %554 = vmatprep.subr.mxu0 0.0
        %555 = vmatpush1.msra.mxu0 0.0
        %556 = vmatprep.subr.mxu0 0.0
        %557 = vmatpush1.msra.mxu0 0.0
        %558 = vmatprep.subr.mxu0 0.0
        %559 = vmatpush1.msra.mxu0 0.0
        %560 = vmatprep.subr.mxu0 %v528
        %561 = vmatpush1.msra.mxu0 %v525
        %562 = vmatprep.subr.mxu0 0.0
        %563 = vmatpush2.msra.mxu0 0.0
        %564 = vmatprep.subr.mxu0 0.0
        %565 = vmatpush2.msra.mxu0 0.0
        %566 = vmatprep.subr.mxu0 0.0
        %567 = vmatpush2.msra.mxu0 0.0
        %568 = vmatprep.subr.mxu0 0.0
        %569 = vmatpush2.msra.mxu0 0.0
        %570 = vmatprep.subr.mxu0 0.0
        %571 = vmatpush2.msra.mxu0 0.0
        %572 = vmatprep.subr.mxu0 0.0
        %573 = vmatpush2.msra.mxu0 0.0
        %574 = vmatprep.subr.mxu0 0.0
        %575 = vmatpush2.msra.mxu0 0.0
        %576 = vmatprep.subr.mxu0 0.0
        %577 = vmatpush2.msra.mxu0 0.0
        %578 = vmatprep.subr.mxu0 0.0
        %579 = vmatpush2.msra.mxu0 0.0
        %580 = vmatprep.subr.mxu0 0.0
        %581 = vmatpush2.msra.mxu0 0.0
        %582 = vmatprep.subr.mxu0 0.0
        %583 = vmatpush2.msra.mxu0 0.0
        %584 = vmatprep.subr.mxu0 0.0
        %585 = vmatpush2.msra.mxu0 0.0
        %586 = vmatprep.subr.mxu0 0.0
        %587 = vmatpush2.msra.mxu0 0.0
        %588 = vmatprep.subr.mxu0 0.0
        %589 = vmatpush2.msra.mxu0 0.0
        %590 = vmatprep.subr.mxu0 0.0
        %591 = vmatpush2.msra.mxu0 0.0
        %592 = vmatprep.subr.mxu0 0.0
        %593 = vmatpush2.msra.mxu0 0.0
        %594 = vmatprep.mubr.f32.mxu0 0.0
        %595 = vmatmul.mubr.f32.gmra.mxu0 %v522
        %v596 = vpop.f32.mrf.mxu0
        %v597 = vadd.f32 0.0, %v596
        %v598 = vpop.f32.mrf.mxu0
        %v599 = vadd.f32 0.0, %v598
        %600 = vdwg.mxu0
        %v603 = vcombine.low %v597, %v599
        %604 = vrot.lane.b32.xlu0 %v603, 17
        %v605 = vpop.permute.xlu0 %604
        %v606 = vrot.slane %v605, 4
        %vm607 = vcmask 138240
        %v608 = vsel %vm607, %v606, %v605
        %v611 = vadd.f32 %v212, %v608
        %v612 = vadd.f32 %v213, %v606
        %615 = vrot.lane.b32.xlu0 %v611, 111
        %v616 = vpop.permute.xlu0 %615
        %617 = vrot.lane.b32.xlu0 %v612, 111
        %v618 = vpop.permute.xlu0 %617
        %v619 = vrot.slane %v616, 4
        %v620 = vrot.slane %v618, 4
        %v621 = vsel %vm421, %v619, %v620
        %v622 = vsel %vm362, %v616, %v621
        %624 = vst [vmem:[%s211] sm:$0xff] %v622
        %s625 = sand.u32 %s97, 1
        %s626 = scalar_lea.sflag [#allocation4], %s625
        %s627 = sand.u32 %s97, 1
        %s628 = smul.addr %s627, 8
        %s629 = scalar_lea.vmem [#allocation8], %s628
        // Predicated region
        $region45: #{tpu_custom_call.1} parent=31 // pred_check
          %p630 = pneg %p107
        $region46: #{tpu_custom_call.1} parent=31 // pred_check_branch
          %632 = sbr.rel (%p630) target = $region48
        $region47: #{tpu_custom_call.1} parent=31 // pred_region
          %s634 = ssub.s32 128, 128
          %635 = vsyncadd %s626, %s634
          %s636 = smul.addr %s21, 2
          %s637 = smul.addr %s636, 64
          %s638 = scalar_lea.hbm %s3, %s637
          %s640 = sshll.u32 %s629, 4
          %s641 = int_to_ptr.vmem [resolvable:$true] %s640
          %643 = dma.vmem_to_hbm [thread:$0]  %s641, 128, %s638, %s626
        $region48: #{tpu_custom_call.1} parent=31 // pred_fallthru
          _
      $region32: #{tpu_custom_call.1} parent=5 // pred_fallthru
        _
      %p644 = scmp.le.s32.totalorder 2, %s16
      // Predicated region
      $region49: #{tpu_custom_call.1} parent=5 // pred_check
        %p645 = pneg %p644
      $region50: #{tpu_custom_call.1} parent=5 // pred_check_branch
        %647 = sbr.rel (%p645) target = $region52
      $region51: #{tpu_custom_call.1} parent=5 // pred_region
        %s648 = ssub.s32 %s16, 2
        // Predicated region
        $region53: #{tpu_custom_call.1} parent=51 // pred_check
          %p649 = pneg %p113
        $region54: #{tpu_custom_call.1} parent=51 // pred_check_branch
          %651 = sbr.rel (%p649) target = $region56
        $region55: #{tpu_custom_call.1} parent=51 // pred_region
          %s652 = sand.u32 %s98, 1
          %s653 = scalar_lea.sflag [#allocation4], %s652
          %s654 = sand.u32 %s98, 1
          %s655 = smul.addr %s654, 8
          %s656 = scalar_lea.vmem [#allocation8], %s655
          %657 = dma.done %s653, 128
        $region56: #{tpu_custom_call.1} parent=51 // pred_fallthru
          _
      $region52: #{tpu_custom_call.1} parent=5 // pred_fallthru
        _
    $region6: #{tpu_custom_call.1} parent=1 // loop_footer
      %s20 = sadd.s32 1, %s16
    $region7: #{tpu_custom_call.1} parent=1 // loop_footer_branch
      %15 = sbr.rel target = $region3
    $region8: #{tpu_custom_call.1} parent=1 // loop_exit
      _
    %658 = vsyncpa [#allocation3], 1
    %s659 = scalar_lea.sflag [#allocation3], 1
    %660 = vsyncpa %s659, 1
    %661 = vsyncpa [#allocation6], 1
    %662 = vsyncpa [#allocation4], 1
    %s663 = scalar_lea.sflag [#allocation4], 1
    %664 = vsyncpa %s663, 1

</llo_original>
